<compile_context>
chip_gen: v5e
topology: v5e:2x2
jax: 0.10.0
libtpu: 0.0.40
codegen_flags: <defaults>
</compile_context>

<pallas_src>
import math

import numpy as np
import jax
import jax.numpy as jnp
from jax.experimental import pallas as pl
from jax.experimental.pallas import tpu as pltpu


# ---------------------------------------------------------------------------
# Kernel: out[d, :] = sum_c w[d,c]*x[c, :] + b[d] + alpha * cos(phase_d)
# ---------------------------------------------------------------------------
def _make_kernel(C, D, tn, *, rZ, Zf, rY, Yf):
    def kernel(coords_ref, x_ref, w_ref, b_ref, pe_ref, alpha_ref, o_ref):
        # coords_ref: (3, n_tiles) f32 SMEM -- (x,y,z) coords of each tile's first voxel
        # x_ref     : (1, C, TN)  VMEM  input features, channels-first
        # w_ref     : (D, C)      VMEM  Linear weight (PyTorch layout)
        # b_ref     : (D, 1)      VMEM  Linear bias column
        # pe_ref    : (D, 4)      VMEM  per-row [inv_x|0, inv_y|0, inv_z|0, shift]
        # alpha_ref : (1,)        SMEM  learnable positional-embedding scale
        # o_ref     : (1, D, TN)  VMEM  lane-dense output tile
        r = pl.program_id(1)
        ts_x = coords_ref[0, r]
        ts_y = coords_ref[1, r]
        ts_z = coords_ref[2, r]

        # ---- packed projection: acc[d, :] = sum_c w[d,c] * x[c, :] + b[d] ----
        x = x_ref[0].astype(jnp.float32)                   # (C, TN)
        w = w_ref[...]                                     # (D, C)
        acc = x[0:1, :] * w[:, 0:1]                        # (1,TN)x(D,1) -> (D,TN)
        for c in range(1, C):
            acc = acc + x[c:c + 1, :] * w[:, c:c + 1]
        acc = acc + b_ref[...]                             # (D,1) lane-broadcast add

        # ---- packed positional embedding --------------------------------
        # Lane index -> global (xi, yi, zi).  All values are small exact f32
        # integers (<= tn + max(X,Y,Z) << 2^24); the +0.5 slack absorbs both
        # floor() rounding and the reciprocal-multiply error.  NOTE: this
        # relies on coords_ref holding per-tile (x,y,z) starts -- do NOT
        # switch to global linear offsets (breaks above ~2^24 voxels).
        j = jax.lax.broadcasted_iota(jnp.int32, (D, tn), 1).astype(jnp.float32)
        a = j + ts_z
        c1 = jnp.floor((a + 0.5) * rZ)                     # carry into y
        zi = a - c1 * Zf
        b2 = c1 + ts_y
        c2 = jnp.floor((b2 + 0.5) * rY)                    # carry into x
        yi = b2 - c2 * Yf
        xi = c2 + ts_x

        # Row d of pe_ref has a single nonzero inv-frequency entry selecting
        # axis d//2, and a pi/2 shift on odd (sin) rows, so one cos() call
        # yields every emb channel, sublane-packed at (D, TN).
        ph = (xi * pe_ref[:, 0:1] + yi * pe_ref[:, 1:2] + zi * pe_ref[:, 2:3]
              - pe_ref[:, 3:4])
        emb = jnp.cos(ph)                                  # (D, TN)

        o_ref[0] = (acc + alpha_ref[0] * emb).astype(o_ref.dtype)

    return kernel


def _pick_spatial_tile(xyz, batch):
    """Lane-dense spatial tile (multiple of 128) with a ragged last tile.

    Per-step VMEM stays <= ~10 MiB double-buffered at the 64Ki cap (well under
    v7x's 64 MiB physical VMEM and the v5e/v6e scoped defaults), and when
    batch == 1 we guarantee >= 2 tiles so both v7x TensorCores receive work.
    """
    cap = 65536
    if xyz <= 1024:
        half = xyz // 2
        if batch == 1 and xyz % 2 == 0 and half % 128 == 0:
            return half                       # two tiles for the two v7x cores
        return xyz                            # full-extent block (always legal, tiny)
    # Prefer an exact divisor (no ragged tail), largest first.
    for t in (65536, 32768, 16384, 8192, 4096, 2048, 1024, 512, 256, 128):
        if t <= cap and xyz % t == 0 and (batch > 1 or xyz // t >= 2):
            return t
    # Ragged fallback: largest 128-multiple <= cap that still gives >= 2 tiles.
    t = (min(xyz // 2, cap) // 128) * 128
    return max(t, 128)


# ---------------------------------------------------------------------------
# Wrapper
# ---------------------------------------------------------------------------
def positional_encoding_forward(feat, weight, bias, alpha):
    """feat: (B, C, X, Y, Z); weight: (D, C); bias: (D,); alpha: (1,)."""
    B, C, X, Y, Z = feat.shape
    D = weight.shape[0]
    assert D <= 6, "module's emb broadcasting only supports dim <= 6"
    XYZ = X * Y * Z
    tn = _pick_spatial_tile(XYZ, B)
    n_tiles = pl.cdiv(XYZ, tn)

    # Channels-first slab: free reshape of the NCDHW input (no transpose pass).
    # bf16 inputs are supported: the kernel upcasts to f32 internally and
    # writes in feat.dtype, halving the dominant HBM streams for bf16 models.
    feat_cf = feat.reshape(B, C, XYZ)
    w = jnp.asarray(weight, jnp.float32)                       # (D, C)
    b = jnp.asarray(bias, jnp.float32).reshape(D, 1)           # (D, 1)
    alpha1 = jnp.asarray(alpha, jnp.float32).reshape(1)

    # Per-row phase constants: row d uses axis d//2; odd rows get a pi/2 shift
    # so cos(phase - shift) == sin(phase).  (n == 1 guard mirrors a sane
    # interpretation of the module's pi/(n-1); never hit for real volumes.)
    inv = [math.pi / (X - 1) if X > 1 else 0.0,
           math.pi / (Y - 1) if Y > 1 else 0.0,
           math.pi / (Z - 1) if Z > 1 else 0.0]
    pe_np = np.zeros((D, 4), np.float32)
    for d in range(D):
        pe_np[d, d // 2] = inv[d // 2]
        pe_np[d, 3] = 0.0 if d % 2 == 0 else math.pi / 2
    pe = jnp.asarray(pe_np)

    # (x, y, z) coordinate of the first voxel of every tile (f32 SMEM table).
    starts = np.arange(n_tiles, dtype=np.int64) * tn
    coords = jnp.asarray(
        np.stack([starts // (Y * Z), (starts // Z) % Y, starts % Z],
                 axis=0).astype(np.float32))                   # (3, n_tiles)

    cost = pl.CostEstimate(
        flops=2 * B * XYZ * C * D,
        transcendentals=B * XYZ * D,
        bytes_accessed=int(feat.dtype.itemsize) * B * XYZ * (C + D),
    )

    out = pl.pallas_call(
        _make_kernel(C, D, tn, rZ=1.0 / Z, Zf=float(Z), rY=1.0 / Y, Yf=float(Y)),
        out_shape=jax.ShapeDtypeStruct((B, D, XYZ), feat.dtype),
        grid_spec=pltpu.PrefetchScalarGridSpec(
            num_scalar_prefetch=0,
            grid=(B, n_tiles),
            in_specs=[
                pl.BlockSpec(memory_space=pltpu.MemorySpace.SMEM),    # tile coords
                pl.BlockSpec((1, C, tn), lambda bb, r: (bb, 0, r)),   # feat tile
                pl.BlockSpec((D, C), lambda bb, r: (0, 0)),           # weight
                pl.BlockSpec((D, 1), lambda bb, r: (0, 0)),           # bias column
                pl.BlockSpec((D, 4), lambda bb, r: (0, 0)),           # phase consts
                pl.BlockSpec(memory_space=pltpu.MemorySpace.SMEM),    # alpha
            ],
            out_specs=pl.BlockSpec((1, D, tn), lambda bb, r: (bb, 0, r)),
        ),
        compiler_params=pltpu.CompilerParams(
            dimension_semantics=("parallel", "parallel"),
            vmem_limit_bytes=32 * 1024 * 1024),
        cost_estimate=cost,
    )(coords, feat_cf, w, b, pe, alpha1)

    # Module contract is channels-last (B, X, Y, Z, D).  Keeping the kernel's
    # stores lane-dense and letting XLA do this small permute (which fuses
    # into the consumer) beats 6/128-masked in-kernel stores.
    # TODO(synk): skip this transpose when the downstream consumer accepts
    # channels-first output.
    return jnp.transpose(out.reshape(B, D, X, Y, Z), (0, 2, 3, 4, 1))


# ---------------------------------------------------------------------------
# Pure-JAX reference (mirrors the PyTorch forward exactly)
# ---------------------------------------------------------------------------
def _build_emb_table(X, Y, Z, dim):
    channels = 2  # module: ceil(dim/6)*2, rounded even; broadcasts only for dim<=6

    def axis_emb(n):
        inv = np.pi / (n - 1) if n > 1 else 0.0
        pos = jnp.arange(n, dtype=jnp.float32) * inv
        return jnp.stack([jnp.cos(pos), jnp.sin(pos)], axis=-1)   # (n, 2)

    ex = jnp.broadcast_to(axis_emb(X)[:, None, None, :], (X, Y, Z, channels))
    ey = jnp.broadcast_to(axis_emb(Y)[None, :, None, :], (X, Y, Z, channels))
    ez = jnp.broadcast_to(axis_emb(Z)[None, None, :, :], (X, Y, Z, channels))
    emb = jnp.concatenate([ex, ey, ez], axis=-1)                  # (X, Y, Z, 6)
    return emb[..., :dim]


def reference_forward(feat, weight, bias, alpha):
    B, C, X, Y, Z = feat.shape
    D = weight.shape[0]
    f = jnp.transpose(feat, (0, 2, 3, 4, 1))                      # (B, X, Y, Z, C)
    proj = jnp.einsum("bxyzc,dc->bxyzd", f, weight) + bias
    emb = _build_emb_table(X, Y, Z, D)
    return proj + alpha[0] * emb[None]


if __name__ == "__main__":
    # Small shapes consistent with the module: 5D volumetric input.
    B, C, X, Y, Z = 2, 4, 8, 8, 8
    DIM = 6

    key = jax.random.PRNGKey(0)
    k_feat, k_w, k_b = jax.random.split(key, 3)

    feat = jax.random.normal(k_feat, (B, C, X, Y, Z), dtype=jnp.float32)
    # Module __init__ zero-inits the projection (trivial output), so use small
    # deterministic random parameters to actually exercise the MAC path.
    weight = 0.1 * jax.random.normal(k_w, (DIM, C), dtype=jnp.float32)
    bias = 0.1 * jax.random.normal(k_b, (DIM,), dtype=jnp.float32)
    alpha = jnp.ones((1,), dtype=jnp.float32)

    out = positional_encoding_forward(feat, weight, bias, alpha)
    out = jax.block_until_ready(out)

    ref = reference_forward(feat, weight, bias, alpha)
    assert out.shape == (B, X, Y, Z, DIM), out.shape
    np.testing.assert_allclose(np.asarray(out), np.asarray(ref),
                               rtol=1e-4, atol=1e-5)

    print("KERNEL_OK")
</pallas_src>

<mosaic_0001>
module attributes {stable_mosaic.version = 11 : i64} {
  func.func @kernel(%arg0: i32, %arg1: i32, %arg2: memref<3x1xf32, #tpu.memory_space<smem>>, %arg3: memref<1x4x512xf32, #tpu.memory_space<vmem>>, %arg4: memref<6x4xf32, #tpu.memory_space<vmem>>, %arg5: memref<6x1xf32, #tpu.memory_space<vmem>>, %arg6: memref<6x4xf32, #tpu.memory_space<vmem>>, %arg7: memref<1xf32, #tpu.memory_space<smem>>, %arg8: memref<1x6x512xf32, #tpu.memory_space<vmem>>) attributes {dimension_semantics = [#tpu.dimension_semantics<parallel>, #tpu.dimension_semantics<parallel>], iteration_bounds = array<i64: 2, 1>, scalar_prefetch = 0 : i64, scratch_operands = 0 : i64, tpu.core_type = #tpu.core_type<tc>, window_params = [{transform_indices = @transform_0, window_bounds = array<i64: 3, 1>}, {transform_indices = @transform_1, window_bounds = array<i64: 1, 4, 512>}, {pipeline_mode = #tpu.pipeline_mode<synchronous>, transform_indices = @transform_2, window_bounds = array<i64: 6, 4>}, {pipeline_mode = #tpu.pipeline_mode<synchronous>, transform_indices = @transform_3, window_bounds = array<i64: 6, 1>}, {pipeline_mode = #tpu.pipeline_mode<synchronous>, transform_indices = @transform_4, window_bounds = array<i64: 6, 4>}, {transform_indices = @transform_5, window_bounds = array<i64: 1>}, {transform_indices = @transform_6, window_bounds = array<i64: 1, 6, 512>}]} {
    %c0 = arith.constant 0 : index
    %0 = arith.index_cast %arg1 : i32 to index
    %1 = memref.load %arg2[%c0, %0] : memref<3x1xf32, #tpu.memory_space<smem>>
    %c1 = arith.constant 1 : index
    %2 = arith.index_cast %arg1 : i32 to index
    %3 = memref.load %arg2[%c1, %2] : memref<3x1xf32, #tpu.memory_space<smem>>
    %c2 = arith.constant 2 : index
    %4 = arith.index_cast %arg1 : i32 to index
    %5 = memref.load %arg2[%c2, %4] : memref<3x1xf32, #tpu.memory_space<smem>>
    %c0_0 = arith.constant 0 : index
    %c0_1 = arith.constant 0 : index
    %c0_2 = arith.constant 0 : index
    %6 = vector.load %arg3[%c0_0, %c0_1, %c0_2] : memref<1x4x512xf32, #tpu.memory_space<vmem>>, vector<1x4x512xf32>
    %7 = vector.shape_cast %6 : vector<1x4x512xf32> to vector<4x512xf32>
    %c0_3 = arith.constant 0 : index
    %c0_4 = arith.constant 0 : index
    %8 = vector.load %arg4[%c0_3, %c0_4] : memref<6x4xf32, #tpu.memory_space<vmem>>, vector<6x4xf32>
    %9 = vector.extract_strided_slice %7 {offsets = [0, 0], sizes = [1, 512], strides = [1, 1]} : vector<4x512xf32> to vector<1x512xf32>
    %10 = vector.extract_strided_slice %8 {offsets = [0, 0], sizes = [6, 1], strides = [1, 1]} : vector<6x4xf32> to vector<6x1xf32>
    %11 = vector.broadcast %9 : vector<1x512xf32> to vector<6x512xf32>
    %12 = vector.broadcast %10 : vector<6x1xf32> to vector<6x512xf32>
    %13 = arith.mulf %11, %12 : vector<6x512xf32>
    %14 = vector.extract_strided_slice %7 {offsets = [1, 0], sizes = [1, 512], strides = [1, 1]} : vector<4x512xf32> to vector<1x512xf32>
    %15 = vector.extract_strided_slice %8 {offsets = [0, 1], sizes = [6, 1], strides = [1, 1]} : vector<6x4xf32> to vector<6x1xf32>
    %16 = vector.broadcast %14 : vector<1x512xf32> to vector<6x512xf32>
    %17 = vector.broadcast %15 : vector<6x1xf32> to vector<6x512xf32>
    %18 = arith.mulf %16, %17 : vector<6x512xf32>
    %19 = arith.addf %13, %18 : vector<6x512xf32>
    %20 = vector.extract_strided_slice %7 {offsets = [2, 0], sizes = [1, 512], strides = [1, 1]} : vector<4x512xf32> to vector<1x512xf32>
    %21 = vector.extract_strided_slice %8 {offsets = [0, 2], sizes = [6, 1], strides = [1, 1]} : vector<6x4xf32> to vector<6x1xf32>
    %22 = vector.broadcast %20 : vector<1x512xf32> to vector<6x512xf32>
    %23 = vector.broadcast %21 : vector<6x1xf32> to vector<6x512xf32>
    %24 = arith.mulf %22, %23 : vector<6x512xf32>
    %25 = arith.addf %19, %24 : vector<6x512xf32>
    %26 = vector.extract_strided_slice %7 {offsets = [3, 0], sizes = [1, 512], strides = [1, 1]} : vector<4x512xf32> to vector<1x512xf32>
    %27 = vector.extract_strided_slice %8 {offsets = [0, 3], sizes = [6, 1], strides = [1, 1]} : vector<6x4xf32> to vector<6x1xf32>
    %28 = vector.broadcast %26 : vector<1x512xf32> to vector<6x512xf32>
    %29 = vector.broadcast %27 : vector<6x1xf32> to vector<6x512xf32>
    %30 = arith.mulf %28, %29 : vector<6x512xf32>
    %31 = arith.addf %25, %30 : vector<6x512xf32>
    %c0_5 = arith.constant 0 : index
    %c0_6 = arith.constant 0 : index
    %32 = vector.load %arg5[%c0_5, %c0_6] : memref<6x1xf32, #tpu.memory_space<vmem>>, vector<6x1xf32>
    %33 = vector.broadcast %32 : vector<6x1xf32> to vector<6x512xf32>
    %34 = arith.addf %31, %33 : vector<6x512xf32>
    %35 = tpu.iota {dimensions = array<i32: 1>} : vector<6x512xi32>
    %36 = arith.sitofp %35 : vector<6x512xi32> to vector<6x512xf32>
    %37 = vector.broadcast %5 : f32 to vector<6x512xf32>
    %38 = arith.addf %36, %37 : vector<6x512xf32>
    %cst = arith.constant 5.000000e-01 : f32
    %39 = vector.broadcast %cst : f32 to vector<6x512xf32>
    %40 = arith.addf %38, %39 : vector<6x512xf32>
    %cst_7 = arith.constant 1.250000e-01 : f32
    %41 = vector.broadcast %cst_7 : f32 to vector<6x512xf32>
    %42 = arith.mulf %40, %41 : vector<6x512xf32>
    %43 = math.floor %42 : vector<6x512xf32>
    %cst_8 = arith.constant 8.000000e+00 : f32
    %44 = vector.broadcast %cst_8 : f32 to vector<6x512xf32>
    %45 = arith.mulf %43, %44 : vector<6x512xf32>
    %46 = arith.subf %38, %45 : vector<6x512xf32>
    %47 = vector.broadcast %3 : f32 to vector<6x512xf32>
    %48 = arith.addf %43, %47 : vector<6x512xf32>
    %cst_9 = arith.constant 5.000000e-01 : f32
    %49 = vector.broadcast %cst_9 : f32 to vector<6x512xf32>
    %50 = arith.addf %48, %49 : vector<6x512xf32>
    %cst_10 = arith.constant 1.250000e-01 : f32
    %51 = vector.broadcast %cst_10 : f32 to vector<6x512xf32>
    %52 = arith.mulf %50, %51 : vector<6x512xf32>
    %53 = math.floor %52 : vector<6x512xf32>
    %cst_11 = arith.constant 8.000000e+00 : f32
    %54 = vector.broadcast %cst_11 : f32 to vector<6x512xf32>
    %55 = arith.mulf %53, %54 : vector<6x512xf32>
    %56 = arith.subf %48, %55 : vector<6x512xf32>
    %57 = vector.broadcast %1 : f32 to vector<6x512xf32>
    %58 = arith.addf %53, %57 : vector<6x512xf32>
    %c0_12 = arith.constant 0 : index
    %c0_13 = arith.constant 0 : index
    %59 = vector.load %arg6[%c0_12, %c0_13] : memref<6x4xf32, #tpu.memory_space<vmem>>, vector<6x1xf32>
    %60 = vector.broadcast %59 : vector<6x1xf32> to vector<6x512xf32>
    %61 = arith.mulf %58, %60 : vector<6x512xf32>
    %c0_14 = arith.constant 0 : index
    %c1_15 = arith.constant 1 : index
    %62 = vector.load %arg6[%c0_14, %c1_15] : memref<6x4xf32, #tpu.memory_space<vmem>>, vector<6x1xf32>
    %63 = vector.broadcast %62 : vector<6x1xf32> to vector<6x512xf32>
    %64 = arith.mulf %56, %63 : vector<6x512xf32>
    %65 = arith.addf %61, %64 : vector<6x512xf32>
    %c0_16 = arith.constant 0 : index
    %c2_17 = arith.constant 2 : index
    %66 = vector.load %arg6[%c0_16, %c2_17] : memref<6x4xf32, #tpu.memory_space<vmem>>, vector<6x1xf32>
    %67 = vector.broadcast %66 : vector<6x1xf32> to vector<6x512xf32>
    %68 = arith.mulf %46, %67 : vector<6x512xf32>
    %69 = arith.addf %65, %68 : vector<6x512xf32>
    %c0_18 = arith.constant 0 : index
    %c3 = arith.constant 3 : index
    %70 = vector.load %arg6[%c0_18, %c3] : memref<6x4xf32, #tpu.memory_space<vmem>>, vector<6x1xf32>
    %71 = vector.broadcast %70 : vector<6x1xf32> to vector<6x512xf32>
    %72 = arith.subf %69, %71 : vector<6x512xf32>
    %73 = math.cos %72 : vector<6x512xf32>
    %c0_19 = arith.constant 0 : index
    %74 = memref.load %arg7[%c0_19] : memref<1xf32, #tpu.memory_space<smem>>
    %75 = vector.broadcast %74 : f32 to vector<6x512xf32>
    %76 = arith.mulf %75, %73 : vector<6x512xf32>
    %77 = arith.addf %34, %76 : vector<6x512xf32>
    %c0_20 = arith.constant 0 : index
    %c0_21 = arith.constant 0 : index
    %c0_22 = arith.constant 0 : index
    %78 = vector.load %arg8[%c0_20, %c0_21, %c0_22] : memref<1x6x512xf32, #tpu.memory_space<vmem>>, vector<1x6x512xf32>
    %79 = vector.shape_cast %78 : vector<1x6x512xf32> to vector<6x512xf32>
    %80 = vector.shape_cast %77 : vector<6x512xf32> to vector<1x6x512xf32>
    tpu.vector_store %arg8[%c0_20, %c0_21, %c0_22], %80 {strides = array<i32>} : memref<1x6x512xf32, #tpu.memory_space<vmem>>, vector<1x6x512xf32>,
    return
  }
  func.func @transform_0(%arg0: i32, %arg1: i32) -> (i32, i32) {
    %c0_i32 = arith.constant 0 : i32
    %c0_i32_0 = arith.constant 0 : i32
    %c0_i32_1 = arith.constant 0 : i32
    return %c0_i32, %c0_i32_0 : i32, i32
  }
  func.func @transform_1(%arg0: i32, %arg1: i32) -> (i32, i32, i32) {
    %c0_i32 = arith.constant 0 : i32
    %c0_i32_0 = arith.constant 0 : i32
    return %arg0, %c0_i32, %arg1 : i32, i32, i32
  }
  func.func @transform_2(%arg0: i32, %arg1: i32) -> (i32, i32) {
    %c0_i32 = arith.constant 0 : i32
    %c0_i32_0 = arith.constant 0 : i32
    %c0_i32_1 = arith.constant 0 : i32
    return %c0_i32, %c0_i32_0 : i32, i32
  }
  func.func @transform_3(%arg0: i32, %arg1: i32) -> (i32, i32) {
    %c0_i32 = arith.constant 0 : i32
    %c0_i32_0 = arith.constant 0 : i32
    %c0_i32_1 = arith.constant 0 : i32
    return %c0_i32, %c0_i32_0 : i32, i32
  }
  func.func @transform_4(%arg0: i32, %arg1: i32) -> (i32, i32) {
    %c0_i32 = arith.constant 0 : i32
    %c0_i32_0 = arith.constant 0 : i32
    %c0_i32_1 = arith.constant 0 : i32
    return %c0_i32, %c0_i32_0 : i32, i32
  }
  func.func @transform_5(%arg0: i32, %arg1: i32) -> i32 {
    %c0_i32 = arith.constant 0 : i32
    %c0_i32_0 = arith.constant 0 : i32
    return %c0_i32 : i32
  }
  func.func @transform_6(%arg0: i32, %arg1: i32) -> (i32, i32, i32) {
    %c0_i32 = arith.constant 0 : i32
    %c0_i32_0 = arith.constant 0 : i32
    return %arg0, %c0_i32, %arg1 : i32, i32, i32
  }
}

</mosaic_0001>

<llo_original>
// kernel: tpu_custom_call.1
$region0: #{tpu_custom_call.1}
  #allocation0 [shape = 'u32[]', space=smem, size = 0x4, offset = 0x4, fixed_abs, tag = 'smem constant byte address 0x4 - core index']
  #allocation1 [shape = 'u32[72,128]{1,0:T(1,128)}', space=vmem, size = 0x9000, scoped, tag = 'internal scratch']
  #allocation2 [shape = 'f32[1]{0:T(128)S(6)}', space=smem, size = 0x200, scoped, tag = 'scoped memory for tpu_custom_call.1']
  %s0 = inlined_call_operand.vmem [shape: f32[3,1], index: 0, kind: input, shape index: {}]
  %s1 = inlined_call_operand.vmem [shape: f32[2,4,512], index: 1, kind: input, shape index: {}]
  %s2 = inlined_call_operand.vmem [shape: f32[6,4], index: 2, kind: input, shape index: {}]
  %s3 = inlined_call_operand.vmem [shape: f32[6,1], index: 3, kind: input, shape index: {}]
  %s4 = inlined_call_operand.vmem [shape: f32[6,4], index: 4, kind: input, shape index: {}]
  %s5 = inlined_call_operand.<no memory space> [shape: f32[1], index: 5, kind: input, shape index: {}]
  %s6 = inlined_call_operand.vmem [shape: f32[2,6,512], index: 6, kind: output, shape index: {}]
  %s7 = sld [smem:[#allocation0]]
  $region61: #{tpu_custom_call.1} parent=0
    _
  %s9 = ssub.s32 1, %s7
  %s10 = scalar_select 0, %s9, %s7
  %11 = sst [smem:[#allocation2]] %s5
  $region1: #{tpu_custom_call.1} parent=0
    #allocation3 [shape = 'u8[2048]{0}', space=smem, size = 0x800, scoped, tag = 'input window, operand 0, single buffered']
    #allocation4 [shape = 's32[2]{0}', space=sflag, size = 0x8, scoped, tag = 'scoped memory for tpu_custom_call.1']
    %12 = vsyncpa [#allocation4], 0
    loop: start=0, step=1, limit=4
    $region2: #{tpu_custom_call.1} parent=1 // loop_pre_header
      _
    $region3: #{tpu_custom_call.1} parent=1 // loop_header
      %s14 = sphi 0, %s18
      %p15 = scmp.ge.s32.totalorder %s14, 4
      %s21 = sphi 0, %s33
      %s22 = sphi 0, %s29
      %s23 = sphi 0, %s21
      %s24 = sphi 0, %s22
      %s25 = sphi 0, %s23
      %s26 = sphi 0, %s24
      %s34 = sphi 0, %s34
      %s36 = sphi 0, %s34
      %s37 = sphi 0, %s36
      %s51 = sphi 0, %s37
      %s59 = sphi 0, %s61
      %s62 = sphi 0, %s59
      %s63 = sphi 0, %s62
      %s79 = sphi 0, %s63
      %s83 = sphi 0, %s83
      %s85 = sphi 0, %s83
      %s86 = sphi 0, %s85
      %s100 = sphi 0, %s86
      %s104 = sphi 0, %s104
      %s106 = sphi 0, %s104
      %s107 = sphi 0, %s106
      %s121 = sphi 0, %s107
      %s125 = sphi 0, %s125
      %s127 = sphi 0, %s125
      %s128 = sphi 0, %s127
      %s142 = sphi 0, %s128
      %s146 = sphi 0, %s146
      %s148 = sphi 0, %s146
      %s149 = sphi 0, %s148
      %s163 = sphi 0, %s149
      %s171 = sphi 0, %s173
      %s174 = sphi 0, %s171
      %s175 = sphi 0, %s174
      %s191 = sphi 0, %s175
    $region4: #{tpu_custom_call.1} parent=1 // loop_header_branch
      %17 = sbr.rel (%p15) target = $region8
    $region5: #{tpu_custom_call.1} parent=1 // loop_body
      %s19 = ssub.s32 %s14, 1
      %s20 = ssub.s32 %s14, 2
      %s27 = sadd.s32 1, %s22
      %p28 = scmp.ge.s32.totalorder %s27, 1
      %s29 = scalar_select %p28, 0, %s27
      %s30 = sadd.s32 1, %s21
      %s31 = scalar_select %p28, %s30, %s21
      %p32 = scmp.ge.s32.totalorder %s31, 2
      %s33 = scalar_select %p32, 0, %s31
      %s35 = sadd.s32 %s34, 1
      %p38 = scmp.eq.s32.totalorder %s14, 1
      %p39 = scmp.ne.s32.totalorder %s34, %s36
      %p40 = scmp.eq.s32.totalorder %s14, 0
      %p41 = por %p39, %p40
      %p42 = scmp.ne.s32.totalorder %s34, %s36
      %p43 = scmp.eq.s32.totalorder %s19, 1
      %p44 = por %p42, %p43
      %p45 = scmp.ne.s32.totalorder %s36, %s37
      %p46 = scmp.eq.s32.totalorder %s19, 0
      %p47 = por %p45, %p46
      %p48 = scmp.ne.s32.totalorder %s36, %s37
      %p49 = scmp.eq.s32.totalorder %s20, 1
      %p50 = por %p48, %p49
      %p52 = scmp.ne.s32.totalorder %s37, %s51
      %p53 = scmp.eq.s32.totalorder %s20, 0
      %p54 = por %p52, %p53
      %s55 = ssub.s32 %s21, %s33
      %s56 = ssub.s32 %s22, %s29
      %s57 = sor.u32 %s55, %s56
      %p58 = scmp.eq.s32.totalorder %s57, 0
      %s60 = sadd.s32 %s59, 1
      %s61 = scalar_select %p58, %s59, %s60
      %p64 = pneg %p58
      %p65 = scmp.eq.s32.totalorder %s14, 1
      %p66 = por %p64, %p65
      %p67 = scmp.ne.s32.totalorder %s59, %s62
      %p68 = scmp.eq.s32.totalorder %s14, 0
      %p69 = por %p67, %p68
      %p70 = scmp.ne.s32.totalorder %s59, %s62
      %p71 = scmp.eq.s32.totalorder %s19, 1
      %p72 = por %p70, %p71
      %p73 = scmp.ne.s32.totalorder %s62, %s63
      %p74 = scmp.eq.s32.totalorder %s19, 0
      %p75 = por %p73, %p74
      %p76 = scmp.ne.s32.totalorder %s62, %s63
      %p77 = scmp.eq.s32.totalorder %s20, 1
      %p78 = por %p76, %p77
      %p80 = scmp.ne.s32.totalorder %s63, %s79
      %p81 = scmp.eq.s32.totalorder %s20, 0
      %p82 = por %p80, %p81
      %s84 = sadd.s32 %s83, 1
      %p87 = scmp.eq.s32.totalorder %s14, 1
      %p88 = scmp.ne.s32.totalorder %s83, %s85
      %p89 = scmp.eq.s32.totalorder %s14, 0
      %p90 = por %p88, %p89
      %p91 = scmp.ne.s32.totalorder %s83, %s85
      %p92 = scmp.eq.s32.totalorder %s19, 1
      %p93 = por %p91, %p92
      %p94 = scmp.ne.s32.totalorder %s85, %s86
      %p95 = scmp.eq.s32.totalorder %s19, 0
      %p96 = por %p94, %p95
      %p97 = scmp.ne.s32.totalorder %s85, %s86
      %p98 = scmp.eq.s32.totalorder %s20, 1
      %p99 = por %p97, %p98
      %p101 = scmp.ne.s32.totalorder %s86, %s100
      %p102 = scmp.eq.s32.totalorder %s20, 0
      %p103 = por %p101, %p102
      %s105 = sadd.s32 %s104, 1
      %p108 = scmp.eq.s32.totalorder %s14, 1
      %p109 = scmp.ne.s32.totalorder %s104, %s106
      %p110 = scmp.eq.s32.totalorder %s14, 0
      %p111 = por %p109, %p110
      %p112 = scmp.ne.s32.totalorder %s104, %s106
      %p113 = scmp.eq.s32.totalorder %s19, 1
      %p114 = por %p112, %p113
      %p115 = scmp.ne.s32.totalorder %s106, %s107
      %p116 = scmp.eq.s32.totalorder %s19, 0
      %p117 = por %p115, %p116
      %p118 = scmp.ne.s32.totalorder %s106, %s107
      %p119 = scmp.eq.s32.totalorder %s20, 1
      %p120 = por %p118, %p119
      %p122 = scmp.ne.s32.totalorder %s107, %s121
      %p123 = scmp.eq.s32.totalorder %s20, 0
      %p124 = por %p122, %p123
      %s126 = sadd.s32 %s125, 1
      %p129 = scmp.eq.s32.totalorder %s14, 1
      %p130 = scmp.ne.s32.totalorder %s125, %s127
      %p131 = scmp.eq.s32.totalorder %s14, 0
      %p132 = por %p130, %p131
      %p133 = scmp.ne.s32.totalorder %s125, %s127
      %p134 = scmp.eq.s32.totalorder %s19, 1
      %p135 = por %p133, %p134
      %p136 = scmp.ne.s32.totalorder %s127, %s128
      %p137 = scmp.eq.s32.totalorder %s19, 0
      %p138 = por %p136, %p137
      %p139 = scmp.ne.s32.totalorder %s127, %s128
      %p140 = scmp.eq.s32.totalorder %s20, 1
      %p141 = por %p139, %p140
      %p143 = scmp.ne.s32.totalorder %s128, %s142
      %p144 = scmp.eq.s32.totalorder %s20, 0
      %p145 = por %p143, %p144
      %s147 = sadd.s32 %s146, 1
      %p150 = scmp.eq.s32.totalorder %s14, 1
      %p151 = scmp.ne.s32.totalorder %s146, %s148
      %p152 = scmp.eq.s32.totalorder %s14, 0
      %p153 = por %p151, %p152
      %p154 = scmp.ne.s32.totalorder %s146, %s148
      %p155 = scmp.eq.s32.totalorder %s19, 1
      %p156 = por %p154, %p155
      %p157 = scmp.ne.s32.totalorder %s148, %s149
      %p158 = scmp.eq.s32.totalorder %s19, 0
      %p159 = por %p157, %p158
      %p160 = scmp.ne.s32.totalorder %s148, %s149
      %p161 = scmp.eq.s32.totalorder %s20, 1
      %p162 = por %p160, %p161
      %p164 = scmp.ne.s32.totalorder %s149, %s163
      %p165 = scmp.eq.s32.totalorder %s20, 0
      %p166 = por %p164, %p165
      %s167 = ssub.s32 %s21, %s33
      %s168 = ssub.s32 %s22, %s29
      %s169 = sor.u32 %s167, %s168
      %p170 = scmp.eq.s32.totalorder %s169, 0
      %s172 = sadd.s32 %s171, 1
      %s173 = scalar_select %p170, %s171, %s172
      %p176 = pneg %p170
      %p177 = scmp.eq.s32.totalorder %s14, 1
      %p178 = por %p176, %p177
      %p179 = scmp.ne.s32.totalorder %s171, %s174
      %p180 = scmp.eq.s32.totalorder %s14, 0
      %p181 = por %p179, %p180
      %p182 = scmp.ne.s32.totalorder %s171, %s174
      %p183 = scmp.eq.s32.totalorder %s19, 1
      %p184 = por %p182, %p183
      %p185 = scmp.ne.s32.totalorder %s174, %s175
      %p186 = scmp.eq.s32.totalorder %s19, 0
      %p187 = por %p185, %p186
      %p188 = scmp.ne.s32.totalorder %s174, %s175
      %p189 = scmp.eq.s32.totalorder %s20, 1
      %p190 = por %p188, %p189
      %p192 = scmp.ne.s32.totalorder %s175, %s191
      %p193 = scmp.eq.s32.totalorder %s20, 0
      %p194 = por %p192, %p193
      %p195 = scmp.le.s32.totalorder 1, %s14
      %p196 = scmp.lt.s32.totalorder %s14, 3
      %p197 = pnand %p195, %p196
      %p198 = pneg %p197
      // Predicated region
      $region9: #{tpu_custom_call.1} parent=5 // pred_check
        _
      $region10: #{tpu_custom_call.1} parent=5 // pred_check_branch
        %200 = sbr.rel (%p197) target = $region12
      $region11: #{tpu_custom_call.1} parent=5 // pred_region
        %s201 = ssub.s32 %s14, 1
        // Predicated region
        $region13: #{tpu_custom_call.1} parent=11 // pred_check
          %p202 = pneg %p47
        $region14: #{tpu_custom_call.1} parent=11 // pred_check_branch
          %204 = sbr.rel (%p202) target = $region16
        $region15: #{tpu_custom_call.1} parent=11 // pred_region
          %206 = vsyncadd [#allocation4], 0
          %s208 = sshll.u32 %s0, 4
          %s209 = int_to_ptr.vmem [resolvable:$true] %s208
          %211 = dma.vmem_to_smem %s209, 64, [#allocation3], [#allocation4]
        $region16: #{tpu_custom_call.1} parent=11 // pred_fallthru
          _
        // Predicated region
        $region17: #{tpu_custom_call.1} parent=11 // pred_check
          %p212 = pneg %p96
        $region18: #{tpu_custom_call.1} parent=11 // pred_check_branch
          %214 = sbr.rel (%p212) target = $region20
        $region19: #{tpu_custom_call.1} parent=11 // pred_region
          _
        $region20: #{tpu_custom_call.1} parent=11 // pred_fallthru
          _
        // Predicated region
        $region21: #{tpu_custom_call.1} parent=11 // pred_check
          %p215 = pneg %p117
        $region22: #{tpu_custom_call.1} parent=11 // pred_check_branch
          %217 = sbr.rel (%p215) target = $region24
        $region23: #{tpu_custom_call.1} parent=11 // pred_region
          _
        $region24: #{tpu_custom_call.1} parent=11 // pred_fallthru
          _
        // Predicated region
        $region25: #{tpu_custom_call.1} parent=11 // pred_check
          %p218 = pneg %p138
        $region26: #{tpu_custom_call.1} parent=11 // pred_check_branch
          %220 = sbr.rel (%p218) target = $region28
        $region27: #{tpu_custom_call.1} parent=11 // pred_region
          _
        $region28: #{tpu_custom_call.1} parent=11 // pred_fallthru
          _
        // Predicated region
        $region29: #{tpu_custom_call.1} parent=11 // pred_check
          %p221 = pneg %p159
        $region30: #{tpu_custom_call.1} parent=11 // pred_check_branch
          %223 = sbr.rel (%p221) target = $region32
        $region31: #{tpu_custom_call.1} parent=11 // pred_region
          _
        $region32: #{tpu_custom_call.1} parent=11 // pred_fallthru
          _
      $region12: #{tpu_custom_call.1} parent=5 // pred_fallthru
        _
      %p224 = scmp.lt.s32.totalorder %s14, 2
      // Predicated region
      $region33: #{tpu_custom_call.1} parent=5 // pred_check
        %p225 = pneg %p224
      $region34: #{tpu_custom_call.1} parent=5 // pred_check_branch
        %227 = sbr.rel (%p225) target = $region36
      $region35: #{tpu_custom_call.1} parent=5 // pred_region
        // Predicated region
        $region37: #{tpu_custom_call.1} parent=35 // pred_check
          %p228 = pneg %p69
        $region38: #{tpu_custom_call.1} parent=35 // pred_check_branch
          %230 = sbr.rel (%p228) target = $region40
        $region39: #{tpu_custom_call.1} parent=35 // pred_region
          %s231 = smul.u32 4, %s22
          %p232 = scmp.lt.s32.totalorder %s21, 1
          %s233 = scalar_select %p232, %s21, 1
          %p234 = scmp.lt.s32.totalorder %s231, 3
          %s235 = scalar_select %p234, %s231, 3
          %s236 = smul.addr %s233, 4
          %s237 = sadd.s32 %s235, %s236
          %s238 = smul.addr %s237, 4
          %s239 = scalar_lea.vmem %s1, %s238
          %s240 = smul.u32 4, %s22
        $region40: #{tpu_custom_call.1} parent=35 // pred_fallthru
          _
      $region36: #{tpu_custom_call.1} parent=5 // pred_fallthru
        _
      %p241 = scmp.le.s32.totalorder 1, %s14
      %p242 = scmp.lt.s32.totalorder %s14, 3
      %p243 = pnand %p241, %p242
      %p244 = pneg %p243
      // Predicated region
      $region41: #{tpu_custom_call.1} parent=5 // pred_check
        _
      $region42: #{tpu_custom_call.1} parent=5 // pred_check_branch
        %246 = sbr.rel (%p243) target = $region44
      $region43: #{tpu_custom_call.1} parent=5 // pred_region
        %s247 = ssub.s32 %s14, 1
        // Predicated region
        $region45: #{tpu_custom_call.1} parent=43 // pred_check
          %p248 = pneg %p47
        $region46: #{tpu_custom_call.1} parent=43 // pred_check_branch
          %250 = sbr.rel (%p248) target = $region48
        $region47: #{tpu_custom_call.1} parent=43 // pred_region
          %252 = dma.done [#allocation4], 64
        $region48: #{tpu_custom_call.1} parent=43 // pred_fallthru
          _
        %253 = sfence
        %p254 = pneg %p47
        %p255 = pneg %p44
        %s256 = smul.u32 4, %s24
        %p257 = scmp.lt.s32.totalorder %s23, 1
        %s258 = scalar_select %p257, %s23, 1
        %p259 = scmp.lt.s32.totalorder %s256, 3
        %s260 = scalar_select %p259, %s256, 3
        %s261 = smul.addr %s258, 4
        %s262 = sadd.s32 %s260, %s261
        %s263 = smul.addr %s262, 4
        %s264 = scalar_lea.vmem %s1, %s263
        %p265 = pneg %p75
        %p266 = pneg %p72
        %p267 = pneg %p96
        %p268 = pneg %p93
        %p269 = pneg %p117
        %p270 = pneg %p114
        %p271 = pneg %p138
        %p272 = pneg %p135
        %p273 = pneg %p159
        %p274 = pneg %p156
        %p275 = pneg %p187
        %p276 = pneg %p184
        %s277 = smul.u32 4, %s24
        %p278 = scmp.lt.s32.totalorder %s23, 1
        %s279 = scalar_select %p278, %s23, 1
        %p280 = scmp.lt.s32.totalorder %s277, 3
        %s281 = scalar_select %p280, %s277, 3
        %s282 = smul.addr %s279, 4
        %s283 = sadd.s32 %s281, %s282
        %s284 = smul.addr %s283, 8
        %s285 = scalar_lea.vmem %s6, %s284
        %s286 = smul.u32 4, %s24
        %p287 = scmp.lt.s32.totalorder %s23, 1
        %s288 = scalar_select %p287, %s23, 1
        %p289 = scmp.lt.s32.totalorder %s286, 3
        %s290 = scalar_select %p289, %s286, 3
        %s291 = smul.addr %s288, 4
        %s292 = sadd.s32 %s290, %s291
        %s293 = smul.addr %s292, 4
        %s294 = scalar_lea.vmem %s1, %s293
        %s295 = smul.u32 4, %s24
        %s296 = smul.u32 4, %s24
        %p297 = scmp.lt.s32.totalorder %s23, 1
        %s298 = scalar_select %p297, %s23, 1
        %p299 = scmp.lt.s32.totalorder %s296, 3
        %s300 = scalar_select %p299, %s296, 3
        %s301 = smul.addr %s298, 4
        %s302 = sadd.s32 %s300, %s301
        %s303 = smul.addr %s302, 8
        %s304 = scalar_lea.vmem %s6, %s303
        %s305 = smul.u32 4, %s24
        %s306 = sld [smem:[#allocation3 + %s24]]
        %s307 = sshra.s32 %s24, 7
        %s308 = sand.u32 %s24, 127
        %s309 = sadd.s32 %s307, 1
        %s310 = smul.u32 %s309, 128
        %s311 = sshra.s32 %s24, 7
        %s312 = sand.u32 %s24, 127
        %s313 = sadd.s32 %s310, %s312
        %s314 = sld [smem:[#allocation3 + %s313]]
        %s315 = sadd.s32 %s307, 2
        %s316 = smul.u32 %s315, 128
        %s317 = sadd.s32 %s316, %s312
        %s318 = sld [smem:[#allocation3 + %s317]]
        %v319 = vld [vmem:[%s294] sm:$0xff]
        %v320 = vld [vmem:[%s294 + $0x8] sm:$0xff]
        %v321 = vld [vmem:[%s2] sm:$0x3f]
        %v324 = vperm.slane %v319, 0
        %v325 = vperm.slane %v319, 4
        %v326 = vperm.slane %v320, 0
        %v327 = vperm.slane %v320, 4
        %v332 = vperm.slane %v324, 0
        %v333 = vperm.slane %v325, 0
        %v334 = vperm.slane %v326, 0
        %v335 = vperm.slane %v327, 0
        %337 = vset.pattern.permute.xlu0 0
        %338 = vperm.xlu0 %337, %v321
        %v339 = vpop.permute.xlu0 %338
        %v341 = vmul.f32 %v332, %v339
        %v342 = vmul.f32 %v333, %v339
        %v343 = vmul.f32 %v334, %v339
        %v344 = vmul.f32 %v335, %v339
        %v345 = vperm.slane %v319, 1
        %v346 = vperm.slane %v319, 5
        %v347 = vperm.slane %v320, 1
        %v348 = vperm.slane %v320, 5
        %v353 = vperm.slane %v345, 1
        %v354 = vperm.slane %v346, 1
        %v355 = vperm.slane %v347, 1
        %v356 = vperm.slane %v348, 1
        %357 = vset.pattern.permute.xlu0 1
        %358 = vperm.xlu0 %357, %v321
        %v359 = vpop.permute.xlu0 %358
        %v361 = vmul.f32 %v353, %v359
        %v362 = vmul.f32 %v354, %v359
        %v363 = vmul.f32 %v355, %v359
        %v364 = vmul.f32 %v356, %v359
        %v365 = vadd.f32 %v341, %v361
        %v366 = vadd.f32 %v342, %v362
        %v367 = vadd.f32 %v343, %v363
        %v368 = vadd.f32 %v344, %v364
        %v369 = vperm.slane %v319, 2
        %v370 = vperm.slane %v319, 6
        %v371 = vperm.slane %v320, 2
        %v372 = vperm.slane %v320, 6
        %v377 = vperm.slane %v369, 2
        %v378 = vperm.slane %v370, 2
        %v379 = vperm.slane %v371, 2
        %v380 = vperm.slane %v372, 2
        %381 = vset.pattern.permute.xlu0 2
        %382 = vperm.xlu0 %381, %v321
        %v383 = vpop.permute.xlu0 %382
        %v385 = vmul.f32 %v377, %v383
        %v386 = vmul.f32 %v378, %v383
        %v387 = vmul.f32 %v379, %v383
        %v388 = vmul.f32 %v380, %v383
        %v389 = vadd.f32 %v365, %v385
        %v390 = vadd.f32 %v366, %v386
        %v391 = vadd.f32 %v367, %v387
        %v392 = vadd.f32 %v368, %v388
        %v393 = vperm.slane %v319, 3
        %v394 = vperm.slane %v319, 7
        %v395 = vperm.slane %v320, 3
        %v396 = vperm.slane %v320, 7
        %v401 = vperm.slane %v393, 3
        %v402 = vperm.slane %v394, 3
        %v403 = vperm.slane %v395, 3
        %v404 = vperm.slane %v396, 3
        %405 = vset.pattern.permute.xlu0 3
        %406 = vperm.xlu0 %405, %v321
        %v407 = vpop.permute.xlu0 %406
        %v409 = vmul.f32 %v401, %v407
        %v410 = vmul.f32 %v402, %v407
        %v411 = vmul.f32 %v403, %v407
        %v412 = vmul.f32 %v404, %v407
        %v413 = vadd.f32 %v389, %v409
        %v414 = vadd.f32 %v390, %v410
        %v415 = vadd.f32 %v391, %v411
        %v416 = vadd.f32 %v392, %v412
        %v417 = vld [vmem:[%s3] sm:$0x3f]
        %419 = vset.pattern.permute.xlu0 0
        %420 = vperm.xlu0 %419, %v417
        %v421 = vpop.permute.xlu0 %420
        %v423 = vadd.f32 %v413, %v421
        %v424 = vadd.f32 %v414, %v421
        %v425 = vadd.f32 %v415, %v421
        %v426 = vadd.f32 %v416, %v421
        %v427 = vlaneseq
        %v428 = vand.u32 %v427, 127
        %v429 = vadd.s32 %v428, 128
        %v430 = vadd.s32 %v428, 256
        %v431 = vadd.s32 %v428, 384
        %v432 = vcvt.s32.f32 %v428
        %v433 = vcvt.s32.f32 %v429
        %v434 = vcvt.s32.f32 %v430
        %v435 = vcvt.s32.f32 %v431
        %v436 = vstv %s318
        %v437 = vadd.f32 %v432, %v436
        %v438 = vadd.f32 %v433, %v436
        %v439 = vadd.f32 %v434, %v436
        %v440 = vadd.f32 %v435, %v436
        %v441 = vadd.f32 %v437, 0.5
        %v442 = vadd.f32 %v438, 0.5
        %v443 = vadd.f32 %v439, 0.5
        %v444 = vadd.f32 %v440, 0.5
        %v445 = vmul.f32 %v441, 0.125
        %v446 = vmul.f32 %v442, 0.125
        %v447 = vmul.f32 %v443, 0.125
        %v448 = vmul.f32 %v444, 0.125
        %v449 = vfloor.f32 %v445
        %v450 = vfloor.f32 %v446
        %v451 = vfloor.f32 %v447
        %v452 = vfloor.f32 %v448
        %v453 = vmul.f32 %v449, 8.0
        %v454 = vmul.f32 %v450, 8.0
        %v455 = vmul.f32 %v451, 8.0
        %v456 = vmul.f32 %v452, 8.0
        %v457 = vsub.f32 %v437, %v453
        %v458 = vsub.f32 %v438, %v454
        %v459 = vsub.f32 %v439, %v455
        %v460 = vsub.f32 %v440, %v456
        %v461 = vstv %s314
        %v462 = vadd.f32 %v449, %v461
        %v463 = vadd.f32 %v450, %v461
        %v464 = vadd.f32 %v451, %v461
        %v465 = vadd.f32 %v452, %v461
        %v466 = vadd.f32 %v462, 0.5
        %v467 = vadd.f32 %v463, 0.5
        %v468 = vadd.f32 %v464, 0.5
        %v469 = vadd.f32 %v465, 0.5
        %v470 = vmul.f32 %v466, 0.125
        %v471 = vmul.f32 %v467, 0.125
        %v472 = vmul.f32 %v468, 0.125
        %v473 = vmul.f32 %v469, 0.125
        %v474 = vfloor.f32 %v470
        %v475 = vfloor.f32 %v471
        %v476 = vfloor.f32 %v472
        %v477 = vfloor.f32 %v473
        %v478 = vmul.f32 %v474, 8.0
        %v479 = vmul.f32 %v475, 8.0
        %v480 = vmul.f32 %v476, 8.0
        %v481 = vmul.f32 %v477, 8.0
        %v482 = vsub.f32 %v462, %v478
        %v483 = vsub.f32 %v463, %v479
        %v484 = vsub.f32 %v464, %v480
        %v485 = vsub.f32 %v465, %v481
        %v486 = vstv %s306
        %v487 = vadd.f32 %v474, %v486
        %v488 = vadd.f32 %v475, %v486
        %v489 = vadd.f32 %v476, %v486
        %v490 = vadd.f32 %v477, %v486
        %v491 = vld [vmem:[%s4] sm:$0x3f]
        %493 = vset.pattern.permute.xlu0 0
        %494 = vperm.xlu0 %493, %v491
        %v495 = vpop.permute.xlu0 %494
        %v497 = vmul.f32 %v487, %v495
        %v498 = vmul.f32 %v488, %v495
        %v499 = vmul.f32 %v489, %v495
        %v500 = vmul.f32 %v490, %v495
        %501 = vset.pattern.permute.xlu0 1
        %502 = vperm.xlu0 %501, %v491
        %v503 = vpop.permute.xlu0 %502
        %v505 = vmul.f32 %v482, %v503
        %v506 = vmul.f32 %v483, %v503
        %v507 = vmul.f32 %v484, %v503
        %v508 = vmul.f32 %v485, %v503
        %v509 = vadd.f32 %v497, %v505
        %v510 = vadd.f32 %v498, %v506
        %v511 = vadd.f32 %v499, %v507
        %v512 = vadd.f32 %v500, %v508
        %513 = vset.pattern.permute.xlu0 2
        %514 = vperm.xlu0 %513, %v491
        %v515 = vpop.permute.xlu0 %514
        %v517 = vmul.f32 %v457, %v515
        %v518 = vmul.f32 %v458, %v515
        %v519 = vmul.f32 %v459, %v515
        %v520 = vmul.f32 %v460, %v515
        %v521 = vadd.f32 %v509, %v517
        %v522 = vadd.f32 %v510, %v518
        %v523 = vadd.f32 %v511, %v519
        %v524 = vadd.f32 %v512, %v520
        %525 = vset.pattern.permute.xlu0 3
        %526 = vperm.xlu0 %525, %v491
        %v527 = vpop.permute.xlu0 %526
        %v529 = vsub.f32 %v521, %v527
        %v530 = vsub.f32 %v522, %v527
        %v531 = vsub.f32 %v523, %v527
        %v532 = vsub.f32 %v524, %v527
        %v533 = vand.u32 2147483647, %v529
        %vm534 = vcmp.le.f32.partialorder %v533, 0.7853982
        %vm535 = vcmp.lt.s32.totalorder %v529, 0
        %v536 = vand.u32 %v529, 2139095040
        %v537 = vshrl.u32 %v536, 23
        %v538 = vsub.s32 %v537, 127
        %v539 = vand.u32 2147483647, %v529
        %v540 = vand.u32 %v539, 8388607
        %v541 = vor.u32 %v540, 8388608
        %v542 = vsub.s32 0, %v541
        %v543 = vadd.s32 %v538, 1
        %vm544 = vcmp.gt.s32.totalorder %v543, 0
        %v545 = vsel %vm544, %v543, 0
        %v546 = vshrl.u32 %v545, 5
        %v547 = vand.u32 %v545, 31
        %v548 = vsub.s32 32, %v547
        %v549 = vshrl.u32 683565275, %v548
        %v550 = vshll.u32 683565275, %v547
        %v551 = vshrl.u32 2475754826, %v548
        %v552 = vor.u32 %v550, %v551
        %v553 = vshll.u32 2475754826, %v547
        %v554 = vshrl.u32 2131351028, %v548
        %v555 = vor.u32 %v553, %v554
        %v556 = vshll.u32 2131351028, %v547
        %v557 = vshrl.u32 2102212464, %v548
        %v558 = vor.u32 %v556, %v557
        %v559 = vshll.u32 2102212464, %v547
        %v560 = vshrl.u32 920167782, %v548
        %v561 = vor.u32 %v559, %v560
        %v562 = vshll.u32 920167782, %v547
        %v563 = vshrl.u32 1326507024, %v548
        %v564 = vor.u32 %v562, %v563
        %vm565 = vcmp.lt.s32.totalorder %v546, 1
        %vm566 = vcmp.lt.s32.totalorder %v546, 2
        %vm567 = vcmp.lt.s32.totalorder %v546, 3
        %vm568 = vcmp.lt.s32.totalorder %v546, 4
        %v569 = vsel %vm565, %v549, %v552
        %v570 = vsel %vm568, %v558, 2102212464
        %v571 = vsel %vm567, %v555, %v570
        %v572 = vsel %vm566, %v569, %v571
        %v573 = vsel %vm565, %v552, %v555
        %v574 = vsel %vm568, %v561, 920167782
        %v575 = vsel %vm567, %v558, %v574
        %v576 = vsel %vm566, %v573, %v575
        %v577 = vsel %vm565, %v555, %v558
        %v578 = vsel %vm568, %v564, 1326507024
        %v579 = vsel %vm567, %v561, %v578
        %v580 = vsel %vm566, %v577, %v579
        %v581 = vshll.u32 %v541, 8
        %v582 = vand.u32 %v581, 65535
        %v583 = vshrl.u32 %v581, 16
        %v584 = vand.u32 %v580, 65535
        %v585 = vshrl.u32 %v580, 16
        %v586 = vmul.u32 %v582, %v584
        %v587 = vmul.u32 %v582, %v585
        %v588 = vmul.u32 %v583, %v584
        %v589 = vmul.u32 %v583, %v585
        %v590 = vshll.u32 %v587, 16
        %v591 = vshrl.u32 %v587, 16
        %v592 = vshll.u32 %v588, 16
        %v593 = vshrl.u32 %v588, 16
        %vm594 = vc.u32 %v586, %v590
        %v595 = vsel %vm594, 1, 0
        %v596 = vadd.s32 %v586, %v590
        %v597 = vadd.s32 %v589, %v595
        %vm598 = vc.u32 %v596, %v592
        %v599 = vsel %vm598, 1, 0
        %v600 = vadd.s32 %v596, %v592
        %v601 = vadd.s32 %v597, %v599
        %v602 = vadd.s32 %v601, %v591
        %v603 = vadd.s32 %v602, %v593
        %v604 = vand.u32 %v581, 65535
        %v605 = vshrl.u32 %v581, 16
        %v606 = vand.u32 %v576, 65535
        %v607 = vshrl.u32 %v576, 16
        %v608 = vmul.u32 %v604, %v606
        %v609 = vmul.u32 %v604, %v607
        %v610 = vmul.u32 %v605, %v606
        %v611 = vmul.u32 %v605, %v607
        %v612 = vshll.u32 %v609, 16
        %v613 = vshrl.u32 %v609, 16
        %v614 = vshll.u32 %v610, 16
        %v615 = vshrl.u32 %v610, 16
        %vm616 = vc.u32 %v608, %v612
        %v617 = vsel %vm616, 1, 0
        %v618 = vadd.s32 %v608, %v612
        %v619 = vadd.s32 %v611, %v617
        %vm620 = vc.u32 %v618, %v614
        %v621 = vsel %vm620, 1, 0
        %v622 = vadd.s32 %v618, %v614
        %v623 = vadd.s32 %v619, %v621
        %v624 = vadd.s32 %v623, %v613
        %v625 = vadd.s32 %v624, %v615
        %v626 = vmul.u32 %v581, %v572
        %v627 = vadd.s32 %v603, %v622
        %vm628 = vc.u32 %v603, %v622
        %v629 = vadd.s32 %v625, 1
        %v630 = vsel %vm628, %v629, %v625
        %v631 = vadd.s32 %v626, %v630
        %v632 = vadd.s32 %v631, 536870912
        %v633 = vshrl.u32 %v632, 30
        %v634 = vshll.u32 %v633, 30
        %v635 = vsub.s32 %v631, %v634
        %vm636 = vcmp.lt.s32.totalorder %v635, 0
        %v637 = vsub.s32 0, %v635
        %v638 = vsel %vm636, %v637, %v635
        %v639 = vclz %v638
        %v640 = vsub.s32 %v639, 2
        %vm641 = vcmp.gt.s32.totalorder 0, %v640
        %v642 = vsel %vm641, 0, %v640
        %v643 = vsub.s32 32, %v642
        %v644 = vshll.u32 %v635, %v642
        %v645 = vshrl.u32 %v627, %v643
        %v646 = vor.u32 %v644, %v645
        %v647 = vsub.s32 4294967266, %v642
        %v648 = vadd.s32 %v647, 127
        %v649 = vshll.u32 %v648, 23
        %v650 = vor.u32 4788187, %v649
        %v651 = vand.u32 2147483647, %v650
        %v653 = vcvt.s32.f32 %v646
        %v654 = vmul.f32 %v653, %v651
        %v655 = vxor.u32 %v654, 2147483648
        %v656 = vsel %vm535, %v655, %v654
        %v657 = vsub.s32 4, %v633
        %v658 = vsel %vm535, %v657, %v633
        %v659 = vsel %vm534, %v529, %v656
        %v660 = vsel %vm534, 0, %v658
        %v661 = vmul.f32 %v659, %v659
        %v662 = vmul.f32 %v661, -0.001358992
        %v663 = vadd.f32 %v662, 0.041655596
        %v664 = vmul.f32 %v661, %v663
        %v665 = vadd.f32 %v664, -0.4999988
        %v666 = vmul.f32 %v661, %v665
        %v667 = vadd.f32 1.0, %v666
        %v668 = vmul.f32 %v659, %v659
        %v669 = vmul.f32 %v668, -0.00019511016
        %v670 = vadd.f32 %v669, 0.008332121
        %v671 = vmul.f32 %v668, %v670
        %v672 = vadd.f32 %v671, -0.16666654
        %v673 = vmul.f32 %v668, %v672
        %v674 = vadd.f32 %v673, 1.0
        %v675 = vmul.f32 %v674, %v659
        %vm676 = vweird.f32 %v529
        %v677 = vand.u32 %v660, 3
        %vm678 = vcmp.lt.s32.totalorder %v677, 2
        %vm679 = vcmp.eq.s32.totalorder %v677, 0
        %v680 = vxor.u32 %v675, 2147483648
        %v681 = vsel %vm679, %v667, %v680
        %vm682 = vcmp.eq.s32.totalorder %v677, 2
        %v683 = vxor.u32 %v667, 2147483648
        %v684 = vsel %vm682, %v683, %v675
        %v685 = vsel %vm678, %v681, %v684
        %v686 = vsel %vm676, nan, %v685
        %v687 = vand.u32 2147483647, %v530
        %vm688 = vcmp.le.f32.partialorder %v687, 0.7853982
        %vm689 = vcmp.lt.s32.totalorder %v530, 0
        %v690 = vand.u32 %v530, 2139095040
        %v691 = vshrl.u32 %v690, 23
        %v692 = vsub.s32 %v691, 127
        %v693 = vand.u32 2147483647, %v530
        %v694 = vand.u32 %v693, 8388607
        %v695 = vor.u32 %v694, 8388608
        %v696 = vsub.s32 0, %v695
        %v697 = vadd.s32 %v692, 1
        %vm698 = vcmp.gt.s32.totalorder %v697, 0
        %v699 = vsel %vm698, %v697, 0
        %v700 = vshrl.u32 %v699, 5
        %v701 = vand.u32 %v699, 31
        %v702 = vsub.s32 32, %v701
        %v703 = vshrl.u32 683565275, %v702
        %v704 = vshll.u32 683565275, %v701
        %v705 = vshrl.u32 2475754826, %v702
        %v706 = vor.u32 %v704, %v705
        %v707 = vshll.u32 2475754826, %v701
        %v708 = vshrl.u32 2131351028, %v702
        %v709 = vor.u32 %v707, %v708
        %v710 = vshll.u32 2131351028, %v701
        %v711 = vshrl.u32 2102212464, %v702
        %v712 = vor.u32 %v710, %v711
        %v713 = vshll.u32 2102212464, %v701
        %v714 = vshrl.u32 920167782, %v702
        %v715 = vor.u32 %v713, %v714
        %v716 = vshll.u32 920167782, %v701
        %v717 = vshrl.u32 1326507024, %v702
        %v718 = vor.u32 %v716, %v717
        %vm719 = vcmp.lt.s32.totalorder %v700, 1
        %vm720 = vcmp.lt.s32.totalorder %v700, 2
        %vm721 = vcmp.lt.s32.totalorder %v700, 3
        %vm722 = vcmp.lt.s32.totalorder %v700, 4
        %v723 = vsel %vm719, %v703, %v706
        %v724 = vsel %vm722, %v712, 2102212464
        %v725 = vsel %vm721, %v709, %v724
        %v726 = vsel %vm720, %v723, %v725
        %v727 = vsel %vm719, %v706, %v709
        %v728 = vsel %vm722, %v715, 920167782
        %v729 = vsel %vm721, %v712, %v728
        %v730 = vsel %vm720, %v727, %v729
        %v731 = vsel %vm719, %v709, %v712
        %v732 = vsel %vm722, %v718, 1326507024
        %v733 = vsel %vm721, %v715, %v732
        %v734 = vsel %vm720, %v731, %v733
        %v735 = vshll.u32 %v695, 8
        %v736 = vand.u32 %v735, 65535
        %v737 = vshrl.u32 %v735, 16
        %v738 = vand.u32 %v734, 65535
        %v739 = vshrl.u32 %v734, 16
        %v740 = vmul.u32 %v736, %v738
        %v741 = vmul.u32 %v736, %v739
        %v742 = vmul.u32 %v737, %v738
        %v743 = vmul.u32 %v737, %v739
        %v744 = vshll.u32 %v741, 16
        %v745 = vshrl.u32 %v741, 16
        %v746 = vshll.u32 %v742, 16
        %v747 = vshrl.u32 %v742, 16
        %vm748 = vc.u32 %v740, %v744
        %v749 = vsel %vm748, 1, 0
        %v750 = vadd.s32 %v740, %v744
        %v751 = vadd.s32 %v743, %v749
        %vm752 = vc.u32 %v750, %v746
        %v753 = vsel %vm752, 1, 0
        %v754 = vadd.s32 %v750, %v746
        %v755 = vadd.s32 %v751, %v753
        %v756 = vadd.s32 %v755, %v745
        %v757 = vadd.s32 %v756, %v747
        %v758 = vand.u32 %v735, 65535
        %v759 = vshrl.u32 %v735, 16
        %v760 = vand.u32 %v730, 65535
        %v761 = vshrl.u32 %v730, 16
        %v762 = vmul.u32 %v758, %v760
        %v763 = vmul.u32 %v758, %v761
        %v764 = vmul.u32 %v759, %v760
        %v765 = vmul.u32 %v759, %v761
        %v766 = vshll.u32 %v763, 16
        %v767 = vshrl.u32 %v763, 16
        %v768 = vshll.u32 %v764, 16
        %v769 = vshrl.u32 %v764, 16
        %vm770 = vc.u32 %v762, %v766
        %v771 = vsel %vm770, 1, 0
        %v772 = vadd.s32 %v762, %v766
        %v773 = vadd.s32 %v765, %v771
        %vm774 = vc.u32 %v772, %v768
        %v775 = vsel %vm774, 1, 0
        %v776 = vadd.s32 %v772, %v768
        %v777 = vadd.s32 %v773, %v775
        %v778 = vadd.s32 %v777, %v767
        %v779 = vadd.s32 %v778, %v769
        %v780 = vmul.u32 %v735, %v726
        %v781 = vadd.s32 %v757, %v776
        %vm782 = vc.u32 %v757, %v776
        %v783 = vadd.s32 %v779, 1
        %v784 = vsel %vm782, %v783, %v779
        %v785 = vadd.s32 %v780, %v784
        %v786 = vadd.s32 %v785, 536870912
        %v787 = vshrl.u32 %v786, 30
        %v788 = vshll.u32 %v787, 30
        %v789 = vsub.s32 %v785, %v788
        %vm790 = vcmp.lt.s32.totalorder %v789, 0
        %v791 = vsub.s32 0, %v789
        %v792 = vsel %vm790, %v791, %v789
        %v793 = vclz %v792
        %v794 = vsub.s32 %v793, 2
        %vm795 = vcmp.gt.s32.totalorder 0, %v794
        %v796 = vsel %vm795, 0, %v794
        %v797 = vsub.s32 32, %v796
        %v798 = vshll.u32 %v789, %v796
        %v799 = vshrl.u32 %v781, %v797
        %v800 = vor.u32 %v798, %v799
        %v801 = vsub.s32 4294967266, %v796
        %v802 = vadd.s32 %v801, 127
        %v803 = vshll.u32 %v802, 23
        %v804 = vor.u32 4788187, %v803
        %v805 = vand.u32 2147483647, %v804
        %v807 = vcvt.s32.f32 %v800
        %v808 = vmul.f32 %v807, %v805
        %v809 = vxor.u32 %v808, 2147483648
        %v810 = vsel %vm689, %v809, %v808
        %v811 = vsub.s32 4, %v787
        %v812 = vsel %vm689, %v811, %v787
        %v813 = vsel %vm688, %v530, %v810
        %v814 = vsel %vm688, 0, %v812
        %v815 = vmul.f32 %v813, %v813
        %v816 = vmul.f32 %v815, -0.001358992
        %v817 = vadd.f32 %v816, 0.041655596
        %v818 = vmul.f32 %v815, %v817
        %v819 = vadd.f32 %v818, -0.4999988
        %v820 = vmul.f32 %v815, %v819
        %v821 = vadd.f32 1.0, %v820
        %v822 = vmul.f32 %v813, %v813
        %v823 = vmul.f32 %v822, -0.00019511016
        %v824 = vadd.f32 %v823, 0.008332121
        %v825 = vmul.f32 %v822, %v824
        %v826 = vadd.f32 %v825, -0.16666654
        %v827 = vmul.f32 %v822, %v826
        %v828 = vadd.f32 %v827, 1.0
        %v829 = vmul.f32 %v828, %v813
        %vm830 = vweird.f32 %v530
        %v831 = vand.u32 %v814, 3
        %vm832 = vcmp.lt.s32.totalorder %v831, 2
        %vm833 = vcmp.eq.s32.totalorder %v831, 0
        %v834 = vxor.u32 %v829, 2147483648
        %v835 = vsel %vm833, %v821, %v834
        %vm836 = vcmp.eq.s32.totalorder %v831, 2
        %v837 = vxor.u32 %v821, 2147483648
        %v838 = vsel %vm836, %v837, %v829
        %v839 = vsel %vm832, %v835, %v838
        %v840 = vsel %vm830, nan, %v839
        %v841 = vand.u32 2147483647, %v531
        %vm842 = vcmp.le.f32.partialorder %v841, 0.7853982
        %vm843 = vcmp.lt.s32.totalorder %v531, 0
        %v844 = vand.u32 %v531, 2139095040
        %v845 = vshrl.u32 %v844, 23
        %v846 = vsub.s32 %v845, 127
        %v847 = vand.u32 2147483647, %v531
        %v848 = vand.u32 %v847, 8388607
        %v849 = vor.u32 %v848, 8388608
        %v850 = vsub.s32 0, %v849
        %v851 = vadd.s32 %v846, 1
        %vm852 = vcmp.gt.s32.totalorder %v851, 0
        %v853 = vsel %vm852, %v851, 0
        %v854 = vshrl.u32 %v853, 5
        %v855 = vand.u32 %v853, 31
        %v856 = vsub.s32 32, %v855
        %v857 = vshrl.u32 683565275, %v856
        %v858 = vshll.u32 683565275, %v855
        %v859 = vshrl.u32 2475754826, %v856
        %v860 = vor.u32 %v858, %v859
        %v861 = vshll.u32 2475754826, %v855
        %v862 = vshrl.u32 2131351028, %v856
        %v863 = vor.u32 %v861, %v862
        %v864 = vshll.u32 2131351028, %v855
        %v865 = vshrl.u32 2102212464, %v856
        %v866 = vor.u32 %v864, %v865
        %v867 = vshll.u32 2102212464, %v855
        %v868 = vshrl.u32 920167782, %v856
        %v869 = vor.u32 %v867, %v868
        %v870 = vshll.u32 920167782, %v855
        %v871 = vshrl.u32 1326507024, %v856
        %v872 = vor.u32 %v870, %v871
        %vm873 = vcmp.lt.s32.totalorder %v854, 1
        %vm874 = vcmp.lt.s32.totalorder %v854, 2
        %vm875 = vcmp.lt.s32.totalorder %v854, 3
        %vm876 = vcmp.lt.s32.totalorder %v854, 4
        %v877 = vsel %vm873, %v857, %v860
        %v878 = vsel %vm876, %v866, 2102212464
        %v879 = vsel %vm875, %v863, %v878
        %v880 = vsel %vm874, %v877, %v879
        %v881 = vsel %vm873, %v860, %v863
        %v882 = vsel %vm876, %v869, 920167782
        %v883 = vsel %vm875, %v866, %v882
        %v884 = vsel %vm874, %v881, %v883
        %v885 = vsel %vm873, %v863, %v866
        %v886 = vsel %vm876, %v872, 1326507024
        %v887 = vsel %vm875, %v869, %v886
        %v888 = vsel %vm874, %v885, %v887
        %v889 = vshll.u32 %v849, 8
        %v890 = vand.u32 %v889, 65535
        %v891 = vshrl.u32 %v889, 16
        %v892 = vand.u32 %v888, 65535
        %v893 = vshrl.u32 %v888, 16
        %v894 = vmul.u32 %v890, %v892
        %v895 = vmul.u32 %v890, %v893
        %v896 = vmul.u32 %v891, %v892
        %v897 = vmul.u32 %v891, %v893
        %v898 = vshll.u32 %v895, 16
        %v899 = vshrl.u32 %v895, 16
        %v900 = vshll.u32 %v896, 16
        %v901 = vshrl.u32 %v896, 16
        %vm902 = vc.u32 %v894, %v898
        %v903 = vsel %vm902, 1, 0
        %v904 = vadd.s32 %v894, %v898
        %v905 = vadd.s32 %v897, %v903
        %vm906 = vc.u32 %v904, %v900
        %v907 = vsel %vm906, 1, 0
        %v908 = vadd.s32 %v904, %v900
        %v909 = vadd.s32 %v905, %v907
        %v910 = vadd.s32 %v909, %v899
        %v911 = vadd.s32 %v910, %v901
        %v912 = vand.u32 %v889, 65535
        %v913 = vshrl.u32 %v889, 16
        %v914 = vand.u32 %v884, 65535
        %v915 = vshrl.u32 %v884, 16
        %v916 = vmul.u32 %v912, %v914
        %v917 = vmul.u32 %v912, %v915
        %v918 = vmul.u32 %v913, %v914
        %v919 = vmul.u32 %v913, %v915
        %v920 = vshll.u32 %v917, 16
        %v921 = vshrl.u32 %v917, 16
        %v922 = vshll.u32 %v918, 16
        %v923 = vshrl.u32 %v918, 16
        %vm924 = vc.u32 %v916, %v920
        %v925 = vsel %vm924, 1, 0
        %v926 = vadd.s32 %v916, %v920
        %v927 = vadd.s32 %v919, %v925
        %vm928 = vc.u32 %v926, %v922
        %v929 = vsel %vm928, 1, 0
        %v930 = vadd.s32 %v926, %v922
        %v931 = vadd.s32 %v927, %v929
        %v932 = vadd.s32 %v931, %v921
        %v933 = vadd.s32 %v932, %v923
        %v934 = vmul.u32 %v889, %v880
        %v935 = vadd.s32 %v911, %v930
        %vm936 = vc.u32 %v911, %v930
        %v937 = vadd.s32 %v933, 1
        %v938 = vsel %vm936, %v937, %v933
        %v939 = vadd.s32 %v934, %v938
        %v940 = vadd.s32 %v939, 536870912
        %v941 = vshrl.u32 %v940, 30
        %v942 = vshll.u32 %v941, 30
        %v943 = vsub.s32 %v939, %v942
        %vm944 = vcmp.lt.s32.totalorder %v943, 0
        %v945 = vsub.s32 0, %v943
        %v946 = vsel %vm944, %v945, %v943
        %v947 = vclz %v946
        %v948 = vsub.s32 %v947, 2
        %vm949 = vcmp.gt.s32.totalorder 0, %v948
        %v950 = vsel %vm949, 0, %v948
        %v951 = vsub.s32 32, %v950
        %v952 = vshll.u32 %v943, %v950
        %v953 = vshrl.u32 %v935, %v951
        %v954 = vor.u32 %v952, %v953
        %v955 = vsub.s32 4294967266, %v950
        %v956 = vadd.s32 %v955, 127
        %v957 = vshll.u32 %v956, 23
        %v958 = vor.u32 4788187, %v957
        %v959 = vand.u32 2147483647, %v958
        %v961 = vcvt.s32.f32 %v954
        %v962 = vmul.f32 %v961, %v959
        %v963 = vxor.u32 %v962, 2147483648
        %v964 = vsel %vm843, %v963, %v962
        %v965 = vsub.s32 4, %v941
        %v966 = vsel %vm843, %v965, %v941
        %v967 = vsel %vm842, %v531, %v964
        %v968 = vsel %vm842, 0, %v966
        %v969 = vmul.f32 %v967, %v967
        %v970 = vmul.f32 %v969, -0.001358992
        %v971 = vadd.f32 %v970, 0.041655596
        %v972 = vmul.f32 %v969, %v971
        %v973 = vadd.f32 %v972, -0.4999988
        %v974 = vmul.f32 %v969, %v973
        %v975 = vadd.f32 1.0, %v974
        %v976 = vmul.f32 %v967, %v967
        %v977 = vmul.f32 %v976, -0.00019511016
        %v978 = vadd.f32 %v977, 0.008332121
        %v979 = vmul.f32 %v976, %v978
        %v980 = vadd.f32 %v979, -0.16666654
        %v981 = vmul.f32 %v976, %v980
        %v982 = vadd.f32 %v981, 1.0
        %v983 = vmul.f32 %v982, %v967
        %vm984 = vweird.f32 %v531
        %v985 = vand.u32 %v968, 3
        %vm986 = vcmp.lt.s32.totalorder %v985, 2
        %vm987 = vcmp.eq.s32.totalorder %v985, 0
        %v988 = vxor.u32 %v983, 2147483648
        %v989 = vsel %vm987, %v975, %v988
        %vm990 = vcmp.eq.s32.totalorder %v985, 2
        %v991 = vxor.u32 %v975, 2147483648
        %v992 = vsel %vm990, %v991, %v983
        %v993 = vsel %vm986, %v989, %v992
        %v994 = vsel %vm984, nan, %v993
        %v995 = vand.u32 2147483647, %v532
        %vm996 = vcmp.le.f32.partialorder %v995, 0.7853982
        %vm997 = vcmp.lt.s32.totalorder %v532, 0
        %v998 = vand.u32 %v532, 2139095040
        %v999 = vshrl.u32 %v998, 23
        %v1000 = vsub.s32 %v999, 127
        %v1001 = vand.u32 2147483647, %v532
        %v1002 = vand.u32 %v1001, 8388607
        %v1003 = vor.u32 %v1002, 8388608
        %v1004 = vsub.s32 0, %v1003
        %v1005 = vadd.s32 %v1000, 1
        %vm1006 = vcmp.gt.s32.totalorder %v1005, 0
        %v1007 = vsel %vm1006, %v1005, 0
        %v1008 = vshrl.u32 %v1007, 5
        %v1009 = vand.u32 %v1007, 31
        %v1010 = vsub.s32 32, %v1009
        %v1011 = vshrl.u32 683565275, %v1010
        %v1012 = vshll.u32 683565275, %v1009
        %v1013 = vshrl.u32 2475754826, %v1010
        %v1014 = vor.u32 %v1012, %v1013
        %v1015 = vshll.u32 2475754826, %v1009
        %v1016 = vshrl.u32 2131351028, %v1010
        %v1017 = vor.u32 %v1015, %v1016
        %v1018 = vshll.u32 2131351028, %v1009
        %v1019 = vshrl.u32 2102212464, %v1010
        %v1020 = vor.u32 %v1018, %v1019
        %v1021 = vshll.u32 2102212464, %v1009
        %v1022 = vshrl.u32 920167782, %v1010
        %v1023 = vor.u32 %v1021, %v1022
        %v1024 = vshll.u32 920167782, %v1009
        %v1025 = vshrl.u32 1326507024, %v1010
        %v1026 = vor.u32 %v1024, %v1025
        %vm1027 = vcmp.lt.s32.totalorder %v1008, 1
        %vm1028 = vcmp.lt.s32.totalorder %v1008, 2
        %vm1029 = vcmp.lt.s32.totalorder %v1008, 3
        %vm1030 = vcmp.lt.s32.totalorder %v1008, 4
        %v1031 = vsel %vm1027, %v1011, %v1014
        %v1032 = vsel %vm1030, %v1020, 2102212464
        %v1033 = vsel %vm1029, %v1017, %v1032
        %v1034 = vsel %vm1028, %v1031, %v1033
        %v1035 = vsel %vm1027, %v1014, %v1017
        %v1036 = vsel %vm1030, %v1023, 920167782
        %v1037 = vsel %vm1029, %v1020, %v1036
        %v1038 = vsel %vm1028, %v1035, %v1037
        %v1039 = vsel %vm1027, %v1017, %v1020
        %v1040 = vsel %vm1030, %v1026, 1326507024
        %v1041 = vsel %vm1029, %v1023, %v1040
        %v1042 = vsel %vm1028, %v1039, %v1041
        %v1043 = vshll.u32 %v1003, 8
        %v1044 = vand.u32 %v1043, 65535
        %v1045 = vshrl.u32 %v1043, 16
        %v1046 = vand.u32 %v1042, 65535
        %v1047 = vshrl.u32 %v1042, 16
        %v1048 = vmul.u32 %v1044, %v1046
        %v1049 = vmul.u32 %v1044, %v1047
        %v1050 = vmul.u32 %v1045, %v1046
        %v1051 = vmul.u32 %v1045, %v1047
        %v1052 = vshll.u32 %v1049, 16
        %v1053 = vshrl.u32 %v1049, 16
        %v1054 = vshll.u32 %v1050, 16
        %v1055 = vshrl.u32 %v1050, 16
        %vm1056 = vc.u32 %v1048, %v1052
        %v1057 = vsel %vm1056, 1, 0
        %v1058 = vadd.s32 %v1048, %v1052
        %v1059 = vadd.s32 %v1051, %v1057
        %vm1060 = vc.u32 %v1058, %v1054
        %v1061 = vsel %vm1060, 1, 0
        %v1062 = vadd.s32 %v1058, %v1054
        %v1063 = vadd.s32 %v1059, %v1061
        %v1064 = vadd.s32 %v1063, %v1053
        %v1065 = vadd.s32 %v1064, %v1055
        %v1066 = vand.u32 %v1043, 65535
        %v1067 = vshrl.u32 %v1043, 16
        %v1068 = vand.u32 %v1038, 65535
        %v1069 = vshrl.u32 %v1038, 16
        %v1070 = vmul.u32 %v1066, %v1068
        %v1071 = vmul.u32 %v1066, %v1069
        %v1072 = vmul.u32 %v1067, %v1068
        %v1073 = vmul.u32 %v1067, %v1069
        %v1074 = vshll.u32 %v1071, 16
        %v1075 = vshrl.u32 %v1071, 16
        %v1076 = vshll.u32 %v1072, 16
        %v1077 = vshrl.u32 %v1072, 16
        %vm1078 = vc.u32 %v1070, %v1074
        %v1079 = vsel %vm1078, 1, 0
        %v1080 = vadd.s32 %v1070, %v1074
        %v1081 = vadd.s32 %v1073, %v1079
        %vm1082 = vc.u32 %v1080, %v1076
        %v1083 = vsel %vm1082, 1, 0
        %v1084 = vadd.s32 %v1080, %v1076
        %v1085 = vadd.s32 %v1081, %v1083
        %v1086 = vadd.s32 %v1085, %v1075
        %v1087 = vadd.s32 %v1086, %v1077
        %v1088 = vmul.u32 %v1043, %v1034
        %v1089 = vadd.s32 %v1065, %v1084
        %vm1090 = vc.u32 %v1065, %v1084
        %v1091 = vadd.s32 %v1087, 1
        %v1092 = vsel %vm1090, %v1091, %v1087
        %v1093 = vadd.s32 %v1088, %v1092
        %v1094 = vadd.s32 %v1093, 536870912
        %v1095 = vshrl.u32 %v1094, 30
        %v1096 = vshll.u32 %v1095, 30
        %v1097 = vsub.s32 %v1093, %v1096
        %vm1098 = vcmp.lt.s32.totalorder %v1097, 0
        %v1099 = vsub.s32 0, %v1097
        %v1100 = vsel %vm1098, %v1099, %v1097
        %v1101 = vclz %v1100
        %v1102 = vsub.s32 %v1101, 2
        %vm1103 = vcmp.gt.s32.totalorder 0, %v1102
        %v1104 = vsel %vm1103, 0, %v1102
        %v1105 = vsub.s32 32, %v1104
        %v1106 = vshll.u32 %v1097, %v1104
        %v1107 = vshrl.u32 %v1089, %v1105
        %v1108 = vor.u32 %v1106, %v1107
        %v1109 = vsub.s32 4294967266, %v1104
        %v1110 = vadd.s32 %v1109, 127
        %v1111 = vshll.u32 %v1110, 23
        %v1112 = vor.u32 4788187, %v1111
        %v1113 = vand.u32 2147483647, %v1112
        %v1115 = vcvt.s32.f32 %v1108
        %v1116 = vmul.f32 %v1115, %v1113
        %v1117 = vxor.u32 %v1116, 2147483648
        %v1118 = vsel %vm997, %v1117, %v1116
        %v1119 = vsub.s32 4, %v1095
        %v1120 = vsel %vm997, %v1119, %v1095
        %v1121 = vsel %vm996, %v532, %v1118
        %v1122 = vsel %vm996, 0, %v1120
        %v1123 = vmul.f32 %v1121, %v1121
        %v1124 = vmul.f32 %v1123, -0.001358992
        %v1125 = vadd.f32 %v1124, 0.041655596
        %v1126 = vmul.f32 %v1123, %v1125
        %v1127 = vadd.f32 %v1126, -0.4999988
        %v1128 = vmul.f32 %v1123, %v1127
        %v1129 = vadd.f32 1.0, %v1128
        %v1130 = vmul.f32 %v1121, %v1121
        %v1131 = vmul.f32 %v1130, -0.00019511016
        %v1132 = vadd.f32 %v1131, 0.008332121
        %v1133 = vmul.f32 %v1130, %v1132
        %v1134 = vadd.f32 %v1133, -0.16666654
        %v1135 = vmul.f32 %v1130, %v1134
        %v1136 = vadd.f32 %v1135, 1.0
        %v1137 = vmul.f32 %v1136, %v1121
        %vm1138 = vweird.f32 %v532
        %v1139 = vand.u32 %v1122, 3
        %vm1140 = vcmp.lt.s32.totalorder %v1139, 2
        %vm1141 = vcmp.eq.s32.totalorder %v1139, 0
        %v1142 = vxor.u32 %v1137, 2147483648
        %v1143 = vsel %vm1141, %v1129, %v1142
        %vm1144 = vcmp.eq.s32.totalorder %v1139, 2
        %v1145 = vxor.u32 %v1129, 2147483648
        %v1146 = vsel %vm1144, %v1145, %v1137
        %v1147 = vsel %vm1140, %v1143, %v1146
        %v1148 = vsel %vm1138, nan, %v1147
        %s1149 = sld [smem:[#allocation2]]
        %v1150 = vstv %s1149
        %v1151 = vmul.f32 %v1150, %v686
        %v1152 = vmul.f32 %v1150, %v840
        %v1153 = vmul.f32 %v1150, %v994
        %v1154 = vmul.f32 %v1150, %v1148
        %v1155 = vadd.f32 %v423, %v1151
        %v1156 = vadd.f32 %v424, %v1152
        %v1157 = vadd.f32 %v425, %v1153
        %v1158 = vadd.f32 %v426, %v1154
        %1159 = vst [vmem:[%s304] sm:$0x3f] %v1155
        %1160 = vst [vmem:[%s304 + $0x8] sm:$0x3f] %v1156
        %1161 = vst [vmem:[%s304 + $0x10] sm:$0x3f] %v1157
        %1162 = vst [vmem:[%s304 + $0x18] sm:$0x3f] %v1158
        %s1163 = smul.u32 4, %s24
        %p1164 = scmp.lt.s32.totalorder %s23, 1
        %s1165 = scalar_select %p1164, %s23, 1
        %p1166 = scmp.lt.s32.totalorder %s1163, 3
        %s1167 = scalar_select %p1166, %s1163, 3
        %s1168 = smul.addr %s1165, 4
        %s1169 = sadd.s32 %s1167, %s1168
        %s1170 = smul.addr %s1169, 8
        %s1171 = scalar_lea.vmem %s6, %s1170
        // Predicated region
        $region49: #{tpu_custom_call.1} parent=43 // pred_check
          %p1172 = pneg %p184
        $region50: #{tpu_custom_call.1} parent=43 // pred_check_branch
          %1174 = sbr.rel (%p1172) target = $region52
        $region51: #{tpu_custom_call.1} parent=43 // pred_region
          %s1175 = smul.u32 4, %s24
        $region52: #{tpu_custom_call.1} parent=43 // pred_fallthru
          _
      $region44: #{tpu_custom_call.1} parent=5 // pred_fallthru
        _
      %p1176 = scmp.le.s32.totalorder 2, %s14
      // Predicated region
      $region53: #{tpu_custom_call.1} parent=5 // pred_check
        %p1177 = pneg %p1176
      $region54: #{tpu_custom_call.1} parent=5 // pred_check_branch
        %1179 = sbr.rel (%p1177) target = $region56
      $region55: #{tpu_custom_call.1} parent=5 // pred_region
        %s1180 = ssub.s32 %s14, 2
        // Predicated region
        $region57: #{tpu_custom_call.1} parent=55 // pred_check
          %p1181 = pneg %p190
        $region58: #{tpu_custom_call.1} parent=55 // pred_check_branch
          %1183 = sbr.rel (%p1181) target = $region60
        $region59: #{tpu_custom_call.1} parent=55 // pred_region
          %s1184 = smul.u32 4, %s26
          %p1185 = scmp.lt.s32.totalorder %s25, 1
          %s1186 = scalar_select %p1185, %s25, 1
          %p1187 = scmp.lt.s32.totalorder %s1184, 3
          %s1188 = scalar_select %p1187, %s1184, 3
          %s1189 = smul.addr %s1186, 4
          %s1190 = sadd.s32 %s1188, %s1189
          %s1191 = smul.addr %s1190, 8
          %s1192 = scalar_lea.vmem %s6, %s1191
        $region60: #{tpu_custom_call.1} parent=55 // pred_fallthru
          _
      $region56: #{tpu_custom_call.1} parent=5 // pred_fallthru
        _
    $region6: #{tpu_custom_call.1} parent=1 // loop_footer
      %s18 = sadd.s32 1, %s14
    $region7: #{tpu_custom_call.1} parent=1 // loop_footer_branch
      %13 = sbr.rel target = $region3
    $region8: #{tpu_custom_call.1} parent=1 // loop_exit
      _
    %1193 = vsyncpa [#allocation4], 1
    %s1194 = scalar_lea.sflag [#allocation4], 1
    %1195 = vsyncpa %s1194, 1

</llo_original>
